<compile_context>
chip_gen: v7x
topology: tpu7x:2x2x1
jax: 0.10.0
libtpu: 0.0.40
codegen_flags: <defaults>
</compile_context>

<pallas_src>
import jax
import jax.numpy as jnp
from jax.experimental import pallas as pl
from jax.experimental.pallas import tpu as pltpu

EPS = 1e-5

INPUT_SIZE = 12            # CN num_features / per-step feature count
WINDOW_SIZE = 10           # implied by .view(B, 12 * 10)
FLAT = INPUT_SIZE * WINDOW_SIZE          # 120
HIDDEN_SIZE = 64
HIDDEN_PAD = 128           # pad hidden dim to a full lane width (zero-padded)
OUTPUT_SIZE = 12
INV_WINDOW = 1.0 / WINDOW_SIZE

MAX_TB = 8192              # batch-tile rows; sweep 4096..16384 per generation
VMEM_LIMIT_BYTES = 48 * 1024 * 1024   # > v5e's 16 MiB scoped default,
                                      # < v7x's 64 MiB physical per-TC VMEM


# ------------------------------ kernel ------------------------------------- #

def fused_mlp_kernel(x_ref, pool_ref, w1_ref, b1_ref, w2_ref, b2_ref, o_ref):
    """CN (over window axis) + Linear(120->64) + ReLU + Linear(64->12), fused.

    x_ref:    (TB, 120)  flattened input tile (index = l*12 + c)
    pool_ref: (120, 120) 0/1 channel-membership matrix, bf16 (exact)
    w1_ref:   (120, 128) first Linear weight, gamma-folded, padded, bf16
    b1_ref:   (1, 128)   first Linear bias, beta-folded, padded, f32
    w2_ref:   (128, 12)  second Linear weight (rows 64..127 zero), bf16
    b2_ref:   (1, 12)    f32
    o_ref:    (TB, 12)
    """
    x_in = x_ref[...]
    x_f32 = x_in.astype(jnp.float32)                       # stats path (f32)
    x_bf = x_in.astype(jnp.bfloat16)                        # MXU operand
    sq_bf = (x_f32 * x_f32).astype(jnp.bfloat16)            # MXU operand

    pool = pool_ref[...]                                    # (120,120) 0/1 bf16
    # Two pooling matmuls back-to-back with the SAME RHS: no VPU op between
    # the MXU pushes, RHS stays in the weight registers.
    sum_x = jnp.dot(x_bf, pool, preferred_element_type=jnp.float32)
    sum_sq = jnp.dot(sq_bf, pool, preferred_element_type=jnp.float32)

    mean = sum_x * INV_WINDOW                               # f32 (TB,120)
    meansq = sum_sq * INV_WINDOW
    # One-pass biased variance; clamp against cancellation before rsqrt.
    var = jnp.maximum(meansq - mean * mean, 0.0)
    xhat = (x_f32 - mean) * jax.lax.rsqrt(var + EPS)        # no affine (folded)

    # MLP head: bf16 operands, f32 accumulation on the MXU.
    h = jnp.dot(xhat.astype(jnp.bfloat16), w1_ref[...],
                preferred_element_type=jnp.float32) + b1_ref[...]
    h = jnp.maximum(h, 0.0)                                 # (TB,128)
    out = jnp.dot(h.astype(jnp.bfloat16), w2_ref[...],
                  preferred_element_type=jnp.float32) + b2_ref[...]
    o_ref[...] = out.astype(o_ref.dtype)                    # (TB,12)


# ------------------------------ wrapper ------------------------------------ #

def _pick_tb(batch: int) -> int:
    """Batch-tile rows.

    Tiny batches use one full-extent tile (block dim == array dim satisfies the
    (8,128) rule).  Otherwise split into at least two grid steps so v7x's two
    TensorCores both get work, keep the tile sublane-aligned (multiple of 8),
    and cap at MAX_TB.
    """
    if batch <= 8:
        return batch
    half = -(-batch // 2)
    return min(MAX_TB, -(-half // 8) * 8)


def fused_forward(x_flat, pool01, w1, b1, w2, b2):
    B, F = x_flat.shape
    H = w1.shape[1]
    O = w2.shape[1]
    tb = _pick_tb(B)
    grid = (pl.cdiv(B, tb),)
    return pl.pallas_call(
        fused_mlp_kernel,
        out_shape=jax.ShapeDtypeStruct((B, O), x_flat.dtype),
        grid=grid,
        in_specs=[
            pl.BlockSpec((tb, F), lambda i: (i, 0)),     # batch-tiled input
            pl.BlockSpec((F, F), lambda i: (0, 0)),      # resident constants
            pl.BlockSpec((F, H), lambda i: (0, 0)),
            pl.BlockSpec((1, H), lambda i: (0, 0)),
            pl.BlockSpec((H, O), lambda i: (0, 0)),
            pl.BlockSpec((1, O), lambda i: (0, 0)),
        ],
        out_specs=pl.BlockSpec((tb, O), lambda i: (i, 0)),
        compiler_params=pltpu.CompilerParams(
            dimension_semantics=("parallel",),
            vmem_limit_bytes=VMEM_LIMIT_BYTES),
    )(x_flat, pool01, w1, b1, w2, b2)


def init_params(key):
    """Build kernel-ready parameters once (no per-call transposes/reshapes).

    PyTorch Linear convention is W:(out,in); we store the transposed, padded,
    gamma/beta-folded, bf16 layout the kernel wants.  gamma/beta are
    randomized here (PyTorch default would be ones/zeros) purely so the
    affine-folding path is actually exercised by the reference checks.
    """
    k1, k2, k3, k4, k5, k6 = jax.random.split(key, 6)
    lim1 = 1.0 / float(jnp.sqrt(jnp.float32(FLAT)))
    lim2 = 1.0 / float(jnp.sqrt(jnp.float32(HIDDEN_SIZE)))

    w1_t = jax.random.uniform(k1, (HIDDEN_SIZE, FLAT), jnp.float32, -lim1, lim1)
    b1_t = jax.random.uniform(k2, (HIDDEN_SIZE,), jnp.float32, -lim1, lim1)
    w2_t = jax.random.uniform(k3, (OUTPUT_SIZE, HIDDEN_SIZE), jnp.float32, -lim2, lim2)
    b2_t = jax.random.uniform(k4, (OUTPUT_SIZE,), jnp.float32, -lim2, lim2)

    gamma = 1.0 + 0.5 * jax.random.uniform(k5, (INPUT_SIZE,), jnp.float32, -1.0, 1.0)
    beta = 0.5 * jax.random.uniform(k6, (INPUT_SIZE,), jnp.float32, -1.0, 1.0)

    # 0/1 channel-membership pooling matrix (exact in bf16); column j of
    # (x @ pool01) sums the window entries of channel j % 12.  The 1/10 scale
    # is applied in f32 inside the kernel.
    ch = jnp.arange(FLAT) % INPUT_SIZE
    pool01 = (ch[:, None] == ch[None, :]).astype(jnp.bfloat16)      # (120,120)

    # Tile gamma/beta to flat width 120 (flat index j -> channel j % 12).
    gamma_t = jnp.tile(gamma, WINDOW_SIZE)                           # (120,)
    beta_t = jnp.tile(beta, WINDOW_SIZE)                             # (120,)

    # Fold the CN affine into the first Linear:
    #   (xhat*γ + β) @ W1ᵀ + b1 == xhat @ (γ[:,None] * W1ᵀ) + (β @ W1ᵀ + b1)
    w1_folded = gamma_t[:, None] * w1_t.T                            # (120,64) f32
    b1_folded = b1_t + beta_t @ w1_t.T                               # (64,)    f32

    # Kernel layout: (in, out), hidden padded 64 -> 128 with zeros, bf16 weights.
    w1 = (jnp.zeros((FLAT, HIDDEN_PAD), jnp.bfloat16)
          .at[:, :HIDDEN_SIZE].set(w1_folded.astype(jnp.bfloat16)))
    b1 = jnp.zeros((1, HIDDEN_PAD), jnp.float32).at[0, :HIDDEN_SIZE].set(b1_folded)
    w2 = (jnp.zeros((HIDDEN_PAD, OUTPUT_SIZE), jnp.bfloat16)
          .at[:HIDDEN_SIZE, :].set(w2_t.T.astype(jnp.bfloat16)))
    b2 = b2_t.reshape(1, OUTPUT_SIZE)

    return {"pool01": pool01, "w1": w1, "b1": b1, "w2": w2, "b2": b2,
            # unfolded f32 copies kept only for the pure-JAX reference checks
            "_gamma": gamma, "_beta": beta,
            "_w1": w1_t, "_b1": b1_t, "_w2": w2_t, "_b2": b2_t}


@jax.jit
def mlp_forward(x, params):
    """Full forward: CN -> flatten -> Linear + ReLU -> Linear, one Pallas call."""
    B = x.shape[0]
    x_flat = x.reshape(B, FLAT)   # contiguous reshape == PyTorch flatten order
    return fused_forward(x_flat, params["pool01"], params["w1"], params["b1"],
                         params["w2"], params["b2"])


# --------------------------- reference checks ------------------------------- #

def kernel_numerics_reference(x, params):
    """Plain-JAX mirror of the kernel's exact math (bf16 MXU operands, folded
    affine, one-pass variance).  Used for a tight plumbing check."""
    B = x.shape[0]
    xf = x.reshape(B, FLAT).astype(jnp.float32)
    xb = xf.astype(jnp.bfloat16)
    sqb = (xf * xf).astype(jnp.bfloat16)
    pool = params["pool01"]
    mean = jnp.dot(xb, pool, preferred_element_type=jnp.float32) * INV_WINDOW
    meansq = jnp.dot(sqb, pool, preferred_element_type=jnp.float32) * INV_WINDOW
    var = jnp.maximum(meansq - mean * mean, 0.0)
    xhat = (xf - mean) * jax.lax.rsqrt(var + EPS)
    h = jnp.dot(xhat.astype(jnp.bfloat16), params["w1"],
                preferred_element_type=jnp.float32) + params["b1"]
    h = jnp.maximum(h, 0.0)
    return jnp.dot(h.astype(jnp.bfloat16), params["w2"],
                   preferred_element_type=jnp.float32) + params["b2"]


def pytorch_reference(x, params):
    """Mirror of the assumed PyTorch semantics, in plain f32 JAX."""
    B = x.shape[0]
    xc = jnp.transpose(x, (0, 2, 1))                          # (B, 12, 10)
    mean = jnp.mean(xc, axis=2, keepdims=True)
    var = jnp.mean((xc - mean) ** 2, axis=2, keepdims=True)   # biased
    xn = (xc - mean) * jax.lax.rsqrt(var + EPS)
    xn = xn * params["_gamma"][None, :, None] + params["_beta"][None, :, None]
    xf = jnp.transpose(xn, (0, 2, 1)).reshape(B, FLAT)        # (B, 120)
    h = jnp.maximum(xf @ params["_w1"].T + params["_b1"], 0.0)
    return h @ params["_w2"].T + params["_b2"]


# --------------------------------- main ------------------------------------- #

if __name__ == "__main__":
    key = jax.random.PRNGKey(0)
    kx, kp = jax.random.split(key)

    B = 2
    x = jax.random.normal(kx, (B, WINDOW_SIZE, INPUT_SIZE), jnp.float32)
    params = init_params(kp)

    out = mlp_forward(x, params)
    out = jax.block_until_ready(out)

    assert out.shape == (B, OUTPUT_SIZE), out.shape
    assert bool(jnp.all(jnp.isfinite(out)))

    # Tight check: kernel vs a plain-JAX mirror of the *same* numerics
    # (bf16 MXU operands, folded affine) -- validates the Pallas plumbing.
    ref_same = kernel_numerics_reference(x, params)
    assert bool(jnp.allclose(out, ref_same, rtol=2e-3, atol=2e-3)), (
        float(jnp.max(jnp.abs(out - ref_same))))

    # Loose check: kernel vs the full-f32 PyTorch-semantics reference.
    # Tolerance relaxed to 1e-2 because the kernel intentionally uses bf16
    # operands on the MXU (f32 accumulation); quantization error is ~1e-3.
    ref_f32 = pytorch_reference(x, params)
    assert bool(jnp.allclose(out, ref_f32, rtol=1e-2, atol=1e-2)), (
        float(jnp.max(jnp.abs(out - ref_f32))))

    print("KERNEL_OK")
</pallas_src>

<mosaic_0001>
module attributes {stable_mosaic.version = 11 : i64} {
  func.func @fused_mlp_kernel(%arg0: i32, %arg1: memref<2x120xf32, #tpu.memory_space<vmem>>, %arg2: memref<120x120xbf16, #tpu.memory_space<vmem>>, %arg3: memref<120x128xbf16, #tpu.memory_space<vmem>>, %arg4: memref<1x128xf32, #tpu.memory_space<vmem>>, %arg5: memref<128x12xbf16, #tpu.memory_space<vmem>>, %arg6: memref<1x12xf32, #tpu.memory_space<vmem>>, %arg7: memref<2x12xf32, #tpu.memory_space<vmem>>) attributes {dimension_semantics = [#tpu.dimension_semantics<parallel>], iteration_bounds = array<i64: 1>, scalar_prefetch = 0 : i64, scratch_operands = 0 : i64, tpu.core_type = #tpu.core_type<tc>, window_params = [{transform_indices = @transform_0, window_bounds = array<i64: 2, 120>}, {pipeline_mode = #tpu.pipeline_mode<synchronous>, transform_indices = @transform_1, window_bounds = array<i64: 120, 120>}, {pipeline_mode = #tpu.pipeline_mode<synchronous>, transform_indices = @transform_2, window_bounds = array<i64: 120, 128>}, {pipeline_mode = #tpu.pipeline_mode<synchronous>, transform_indices = @transform_3, window_bounds = array<i64: 1, 128>}, {pipeline_mode = #tpu.pipeline_mode<synchronous>, transform_indices = @transform_4, window_bounds = array<i64: 128, 12>}, {pipeline_mode = #tpu.pipeline_mode<synchronous>, transform_indices = @transform_5, window_bounds = array<i64: 1, 12>}, {transform_indices = @transform_6, window_bounds = array<i64: 2, 12>}]} {
    %c0 = arith.constant 0 : index
    %c0_0 = arith.constant 0 : index
    %0 = vector.load %arg1[%c0, %c0_0] : memref<2x120xf32, #tpu.memory_space<vmem>>, vector<2x120xf32>
    %1 = arith.truncf %0 : vector<2x120xf32> to vector<2x120xbf16>
    %2 = arith.mulf %0, %0 : vector<2x120xf32>
    %3 = arith.truncf %2 : vector<2x120xf32> to vector<2x120xbf16>
    %c0_1 = arith.constant 0 : index
    %c0_2 = arith.constant 0 : index
    %4 = vector.load %arg2[%c0_1, %c0_2] : memref<120x120xbf16, #tpu.memory_space<vmem>>, vector<120x120xbf16>
    %cst = arith.constant dense<0.000000e+00> : vector<2x120xf32>
    %5 = tpu.matmul %1, %4, %cst {dimension_numbers = #tpu.dot_dimension_numbers<[1], [0], [0], [1], [0, 0, 1, 1], [], []>} : vector<2x120xbf16>, vector<120x120xbf16>, vector<2x120xf32> -> vector<2x120xf32>
    %cst_3 = arith.constant dense<0.000000e+00> : vector<2x120xf32>
    %6 = tpu.matmul %3, %4, %cst_3 {dimension_numbers = #tpu.dot_dimension_numbers<[1], [0], [0], [1], [0, 0, 1, 1], [], []>} : vector<2x120xbf16>, vector<120x120xbf16>, vector<2x120xf32> -> vector<2x120xf32>
    %cst_4 = arith.constant 1.000000e-01 : f32
    %7 = vector.broadcast %cst_4 : f32 to vector<2x120xf32>
    %8 = arith.mulf %5, %7 : vector<2x120xf32>
    %cst_5 = arith.constant 1.000000e-01 : f32
    %9 = vector.broadcast %cst_5 : f32 to vector<2x120xf32>
    %10 = arith.mulf %6, %9 : vector<2x120xf32>
    %11 = arith.mulf %8, %8 : vector<2x120xf32>
    %12 = arith.subf %10, %11 : vector<2x120xf32>
    %cst_6 = arith.constant 0.000000e+00 : f32
    %13 = vector.broadcast %cst_6 : f32 to vector<2x120xf32>
    %14 = arith.maximumf %12, %13 : vector<2x120xf32>
    %15 = arith.subf %0, %8 : vector<2x120xf32>
    %cst_7 = arith.constant 9.99999974E-6 : f32
    %16 = vector.broadcast %cst_7 : f32 to vector<2x120xf32>
    %17 = arith.addf %14, %16 : vector<2x120xf32>
    %18 = math.rsqrt %17 : vector<2x120xf32>
    %19 = arith.mulf %15, %18 : vector<2x120xf32>
    %20 = arith.truncf %19 : vector<2x120xf32> to vector<2x120xbf16>
    %c0_8 = arith.constant 0 : index
    %c0_9 = arith.constant 0 : index
    %21 = vector.load %arg3[%c0_8, %c0_9] : memref<120x128xbf16, #tpu.memory_space<vmem>>, vector<120x128xbf16>
    %cst_10 = arith.constant dense<0.000000e+00> : vector<2x128xf32>
    %22 = tpu.matmul %20, %21, %cst_10 {dimension_numbers = #tpu.dot_dimension_numbers<[1], [0], [0], [1], [0, 0, 1, 1], [], []>} : vector<2x120xbf16>, vector<120x128xbf16>, vector<2x128xf32> -> vector<2x128xf32>
    %c0_11 = arith.constant 0 : index
    %c0_12 = arith.constant 0 : index
    %23 = vector.load %arg4[%c0_11, %c0_12] : memref<1x128xf32, #tpu.memory_space<vmem>>, vector<1x128xf32>
    %24 = vector.broadcast %23 : vector<1x128xf32> to vector<2x128xf32>
    %25 = arith.addf %22, %24 : vector<2x128xf32>
    %cst_13 = arith.constant 0.000000e+00 : f32
    %26 = vector.broadcast %cst_13 : f32 to vector<2x128xf32>
    %27 = arith.maximumf %25, %26 : vector<2x128xf32>
    %28 = arith.truncf %27 : vector<2x128xf32> to vector<2x128xbf16>
    %c0_14 = arith.constant 0 : index
    %c0_15 = arith.constant 0 : index
    %29 = vector.load %arg5[%c0_14, %c0_15] : memref<128x12xbf16, #tpu.memory_space<vmem>>, vector<128x12xbf16>
    %cst_16 = arith.constant dense<0.000000e+00> : vector<2x12xf32>
    %30 = tpu.matmul %28, %29, %cst_16 {dimension_numbers = #tpu.dot_dimension_numbers<[1], [0], [0], [1], [0, 0, 1, 1], [], []>} : vector<2x128xbf16>, vector<128x12xbf16>, vector<2x12xf32> -> vector<2x12xf32>
    %c0_17 = arith.constant 0 : index
    %c0_18 = arith.constant 0 : index
    %31 = vector.load %arg6[%c0_17, %c0_18] : memref<1x12xf32, #tpu.memory_space<vmem>>, vector<1x12xf32>
    %32 = vector.broadcast %31 : vector<1x12xf32> to vector<2x12xf32>
    %33 = arith.addf %30, %32 : vector<2x12xf32>
    %c0_19 = arith.constant 0 : index
    %c0_20 = arith.constant 0 : index
    %34 = vector.load %arg7[%c0_19, %c0_20] : memref<2x12xf32, #tpu.memory_space<vmem>>, vector<2x12xf32>
    tpu.vector_store %arg7[%c0_19, %c0_20], %33 {strides = array<i32>} : memref<2x12xf32, #tpu.memory_space<vmem>>, vector<2x12xf32>,
    return
  }
  func.func @transform_0(%arg0: i32) -> (i32, i32) {
    %c0_i32 = arith.constant 0 : i32
    %c0_i32_0 = arith.constant 0 : i32
    return %arg0, %c0_i32 : i32, i32
  }
  func.func @transform_1(%arg0: i32) -> (i32, i32) {
    %c0_i32 = arith.constant 0 : i32
    %c0_i32_0 = arith.constant 0 : i32
    %c0_i32_1 = arith.constant 0 : i32
    return %c0_i32, %c0_i32_0 : i32, i32
  }
  func.func @transform_2(%arg0: i32) -> (i32, i32) {
    %c0_i32 = arith.constant 0 : i32
    %c0_i32_0 = arith.constant 0 : i32
    %c0_i32_1 = arith.constant 0 : i32
    return %c0_i32, %c0_i32_0 : i32, i32
  }
  func.func @transform_3(%arg0: i32) -> (i32, i32) {
    %c0_i32 = arith.constant 0 : i32
    %c0_i32_0 = arith.constant 0 : i32
    %c0_i32_1 = arith.constant 0 : i32
    return %c0_i32, %c0_i32_0 : i32, i32
  }
  func.func @transform_4(%arg0: i32) -> (i32, i32) {
    %c0_i32 = arith.constant 0 : i32
    %c0_i32_0 = arith.constant 0 : i32
    %c0_i32_1 = arith.constant 0 : i32
    return %c0_i32, %c0_i32_0 : i32, i32
  }
  func.func @transform_5(%arg0: i32) -> (i32, i32) {
    %c0_i32 = arith.constant 0 : i32
    %c0_i32_0 = arith.constant 0 : i32
    %c0_i32_1 = arith.constant 0 : i32
    return %c0_i32, %c0_i32_0 : i32, i32
  }
  func.func @transform_6(%arg0: i32) -> (i32, i32) {
    %c0_i32 = arith.constant 0 : i32
    %c0_i32_0 = arith.constant 0 : i32
    return %arg0, %c0_i32 : i32, i32
  }
}

</mosaic_0001>

<llo_original>
// kernel: mlp_forward.1
$region0: #{mlp_forward.1}
  #allocation0 [shape = 'u32[]', space=smem, size = 0x4, offset = 0x4, fixed_abs, tag = 'smem constant byte address 0x4 - core index']
  #allocation1 [shape = 'u32[144,128]{1,0:T(1,128)}', space=vmem, size = 0x12000, scoped, tag = 'internal scratch']
  %s0 = inlined_call_operand.vmem [shape: f32[2,120], index: 0, kind: input, shape index: {}]
  %s1 = inlined_call_operand.vmem [shape: bf16[120,120], index: 1, kind: input, shape index: {}]
  %s2 = inlined_call_operand.vmem [shape: bf16[120,128], index: 2, kind: input, shape index: {}]
  %s3 = inlined_call_operand.vmem [shape: f32[1,128], index: 3, kind: input, shape index: {}]
  %s4 = inlined_call_operand.vmem [shape: bf16[128,12], index: 4, kind: input, shape index: {}]
  %s5 = inlined_call_operand.vmem [shape: f32[1,12], index: 5, kind: input, shape index: {}]
  %s6 = inlined_call_operand.hbm [shape: f32[2,12], index: 6, kind: output, shape index: {}]
  %s7 = sld [smem:[#allocation0]]
  $region34: #{mlp_forward.1} parent=0
    _
  %s9 = ssub.s32 1, %s7
  %s10 = scalar_select 0, %s9, %s7
  $region1: #{mlp_forward.1} parent=0
    #allocation2 [shape = 'u8[1024]{0}', space=vmem, size = 0x400, scoped, tag = 'output window, operand 0, single buffered']
    #allocation3 [shape = 's32[1]{0}', space=sflag, size = 0x4, scoped, tag = 'scoped memory for mlp_forward.1']
    %11 = vsyncpa [#allocation3], 0
    // Predicated region
    $region2: #{mlp_forward.1} parent=1 // pred_check
      _
    $region3: #{mlp_forward.1} parent=1 // pred_check_branch
      %13 = sbr.rel (0) target = $region5
    $region4: #{mlp_forward.1} parent=1 // pred_region
      _
    $region5: #{mlp_forward.1} parent=1 // pred_fallthru
      _
    // Predicated region
    $region6: #{mlp_forward.1} parent=1 // pred_check
      _
    $region7: #{mlp_forward.1} parent=1 // pred_check_branch
      %15 = sbr.rel (0) target = $region9
    $region8: #{mlp_forward.1} parent=1 // pred_region
      _
    $region9: #{mlp_forward.1} parent=1 // pred_fallthru
      _
    // Predicated region
    $region10: #{mlp_forward.1} parent=1 // pred_check
      _
    $region11: #{mlp_forward.1} parent=1 // pred_check_branch
      %17 = sbr.rel (0) target = $region13
    $region12: #{mlp_forward.1} parent=1 // pred_region
      _
    $region13: #{mlp_forward.1} parent=1 // pred_fallthru
      _
    // Predicated region
    $region14: #{mlp_forward.1} parent=1 // pred_check
      _
    $region15: #{mlp_forward.1} parent=1 // pred_check_branch
      %19 = sbr.rel (0) target = $region17
    $region16: #{mlp_forward.1} parent=1 // pred_region
      _
    $region17: #{mlp_forward.1} parent=1 // pred_fallthru
      _
    // Predicated region
    $region18: #{mlp_forward.1} parent=1 // pred_check
      _
    $region19: #{mlp_forward.1} parent=1 // pred_check_branch
      %21 = sbr.rel (0) target = $region21
    $region20: #{mlp_forward.1} parent=1 // pred_region
      _
    $region21: #{mlp_forward.1} parent=1 // pred_fallthru
      _
    // Predicated region
    $region22: #{mlp_forward.1} parent=1 // pred_check
      _
    $region23: #{mlp_forward.1} parent=1 // pred_check_branch
      %23 = sbr.rel (0) target = $region25
    $region24: #{mlp_forward.1} parent=1 // pred_region
      _
    $region25: #{mlp_forward.1} parent=1 // pred_fallthru
      _
    %v25 = vld [vmem:[%s0] sm:$0x3]
    %v26 = vpack.c.bf16 %v25, %v25
    %v27 = vmul.f32 %v25, %v25
    %v28 = vpack.c.bf16 %v27, %v27
    %v29 = vld [vmem:[%s1] sm:$0xf]
    %v30 = vld [vmem:[%s1 + $0x4] sm:$0xf]
    %v31 = vld [vmem:[%s1 + $0x8] sm:$0xf]
    %v32 = vld [vmem:[%s1 + $0xc] sm:$0xf]
    %v33 = vld [vmem:[%s1 + $0x10] sm:$0xf]
    %v34 = vld [vmem:[%s1 + $0x14] sm:$0xf]
    %v35 = vld [vmem:[%s1 + $0x18] sm:$0xf]
    %v36 = vld [vmem:[%s1 + $0x1c] sm:$0xf]
    %v37 = vld [vmem:[%s1 + $0x20] sm:$0xf]
    %v38 = vld [vmem:[%s1 + $0x24] sm:$0xf]
    %v39 = vld [vmem:[%s1 + $0x28] sm:$0xf]
    %v40 = vld [vmem:[%s1 + $0x2c] sm:$0xf]
    %v41 = vld [vmem:[%s1 + $0x30] sm:$0xf]
    %v42 = vld [vmem:[%s1 + $0x34] sm:$0xf]
    %v43 = vld [vmem:[%s1 + $0x38] sm:$0xf]
    %v59 = vunpack.c.l.b16 %v29
    %v60 = vunpack.c.l.b16 %v30
    %v61 = vunpack.c.l.b16 %v31
    %v62 = vunpack.c.l.b16 %v32
    %v63 = vunpack.c.l.b16 %v33
    %v64 = vunpack.c.l.b16 %v34
    %v65 = vunpack.c.l.b16 %v35
    %v66 = vunpack.c.l.b16 %v36
    %v67 = vunpack.c.l.b16 %v37
    %v68 = vunpack.c.l.b16 %v38
    %v69 = vunpack.c.l.b16 %v39
    %v70 = vunpack.c.l.b16 %v40
    %v71 = vunpack.c.l.b16 %v41
    %v72 = vunpack.c.l.b16 %v42
    %v73 = vunpack.c.l.b16 %v43
    %v74 = vpack.c.b16 %v60, %v59
    %v75 = vpack.c.b16 %v62, %v61
    %v76 = vpack.c.b16 %v64, %v63
    %v77 = vpack.c.b16 %v66, %v65
    %v78 = vpack.c.b16 %v68, %v67
    %v79 = vpack.c.b16 %v70, %v69
    %v80 = vpack.c.b16 %v72, %v71
    %v81 = vpack.c.b16 %v73, %v73
    %vm89 = vcmask 982016
    %v91 = vsel %vm89, %v26, 0
    %vm93 = vcmask 1043456
    %v95 = vsel %vm93, %v81, 0
    %97 = vmatprep.subr.bf16.mxu0 0
    %98 = vmatpush1.bf16.msra.mxu0 %v74
    %99 = vmatprep.subr.bf16.mxu0 0
    %100 = vmatpush1.bf16.msra.mxu0 %v75
    %101 = vmatprep.subr.bf16.mxu0 0
    %102 = vmatpush1.bf16.msra.mxu0 %v76
    %103 = vmatprep.subr.bf16.mxu0 0
    %104 = vmatpush1.bf16.msra.mxu0 %v77
    %105 = vmatprep.subr.bf16.mxu0 0
    %106 = vmatpush1.bf16.msra.mxu0 %v78
    %107 = vmatprep.subr.bf16.mxu0 0
    %108 = vmatpush1.bf16.msra.mxu0 %v79
    %109 = vmatprep.subr.bf16.mxu0 0
    %110 = vmatpush1.bf16.msra.mxu0 %v80
    %111 = vmatprep.subr.bf16.mxu0 0
    %112 = vmatpush1.bf16.msra.mxu0 %v95
    %113 = vmatprep.subr.bf16.mxu0 0
    %114 = vmatpush1.bf16.msra.mxu0 0
    %115 = vmatprep.subr.bf16.mxu0 0
    %116 = vmatpush1.bf16.msra.mxu0 0
    %117 = vmatprep.subr.bf16.mxu0 0
    %118 = vmatpush1.bf16.msra.mxu0 0
    %119 = vmatprep.subr.bf16.mxu0 0
    %120 = vmatpush1.bf16.msra.mxu0 0
    %121 = vmatprep.subr.bf16.mxu0 0
    %122 = vmatpush1.bf16.msra.mxu0 0
    %123 = vmatprep.subr.bf16.mxu0 0
    %124 = vmatpush1.bf16.msra.mxu0 0
    %125 = vmatprep.subr.bf16.mxu0 0
    %126 = vmatpush1.bf16.msra.mxu0 0
    %127 = vmatprep.subr.bf16.mxu0 0
    %128 = vmatpush1.bf16.msra.mxu0 0
    %129 = vmatprep.mubr.bf16.mxu0 0
    %130 = vmatmul.mubr.bf16.gmra.mrb[0].mxu0 %v91
    %v131 = vpop.f32.mrb[0].mxu0
    %v132 = vadd.f32 0.0, %v131
    %v133 = vpop.f32.mrb[0].mxu0
    %v134 = vpop.f32.mrb[0].mxu0
    %v135 = vpop.f32.mrb[0].mxu0
    %136 = vdwg.mxu0
    %v138 = vsel %vm89, %v28, 0
    %140 = vmatprep.subr.bf16.mxu0 0
    %141 = vmatpush1.bf16.msra.mxu0 %v74
    %142 = vmatprep.subr.bf16.mxu0 0
    %143 = vmatpush1.bf16.msra.mxu0 %v75
    %144 = vmatprep.subr.bf16.mxu0 0
    %145 = vmatpush1.bf16.msra.mxu0 %v76
    %146 = vmatprep.subr.bf16.mxu0 0
    %147 = vmatpush1.bf16.msra.mxu0 %v77
    %148 = vmatprep.subr.bf16.mxu0 0
    %149 = vmatpush1.bf16.msra.mxu0 %v78
    %150 = vmatprep.subr.bf16.mxu0 0
    %151 = vmatpush1.bf16.msra.mxu0 %v79
    %152 = vmatprep.subr.bf16.mxu0 0
    %153 = vmatpush1.bf16.msra.mxu0 %v80
    %154 = vmatprep.subr.bf16.mxu0 0
    %155 = vmatpush1.bf16.msra.mxu0 %v95
    %156 = vmatprep.subr.bf16.mxu0 0
    %157 = vmatpush1.bf16.msra.mxu0 0
    %158 = vmatprep.subr.bf16.mxu0 0
    %159 = vmatpush1.bf16.msra.mxu0 0
    %160 = vmatprep.subr.bf16.mxu0 0
    %161 = vmatpush1.bf16.msra.mxu0 0
    %162 = vmatprep.subr.bf16.mxu0 0
    %163 = vmatpush1.bf16.msra.mxu0 0
    %164 = vmatprep.subr.bf16.mxu0 0
    %165 = vmatpush1.bf16.msra.mxu0 0
    %166 = vmatprep.subr.bf16.mxu0 0
    %167 = vmatpush1.bf16.msra.mxu0 0
    %168 = vmatprep.subr.bf16.mxu0 0
    %169 = vmatpush1.bf16.msra.mxu0 0
    %170 = vmatprep.subr.bf16.mxu0 0
    %171 = vmatpush1.bf16.msra.mxu0 0
    %172 = vmatprep.mubr.bf16.mxu0 0
    %173 = vmatmul.mubr.bf16.gmra.mrb[0].mxu0 %v138
    %v174 = vpop.f32.mrb[0].mxu0
    %v175 = vadd.f32 0.0, %v174
    %v176 = vpop.f32.mrb[0].mxu0
    %v177 = vpop.f32.mrb[0].mxu0
    %v178 = vpop.f32.mrb[0].mxu0
    %179 = vdwg.mxu0
    %v180 = vmul.f32 %v132, 0.1
    %v181 = vmul.f32 %v175, 0.1
    %v182 = vmul.f32 %v180, %v180
    %v183 = vsub.f32 %v181, %v182
    %v184 = vmax.f32 %v183, 0.0
    %v185 = vsub.f32 %v25, %v180
    %v186 = vadd.f32 %v184, 1e-05
    %v187 = vrsqrt.pop %v186
    %v188 = vmul.f32 %v185, %v187
    %v189 = vpack.c.bf16 %v188, %v188
    %v190 = vld [vmem:[%s2] sm:$0xf]
    %v191 = vld [vmem:[%s2 + $0x4] sm:$0xf]
    %v192 = vld [vmem:[%s2 + $0x8] sm:$0xf]
    %v193 = vld [vmem:[%s2 + $0xc] sm:$0xf]
    %v194 = vld [vmem:[%s2 + $0x10] sm:$0xf]
    %v195 = vld [vmem:[%s2 + $0x14] sm:$0xf]
    %v196 = vld [vmem:[%s2 + $0x18] sm:$0xf]
    %v197 = vld [vmem:[%s2 + $0x1c] sm:$0xf]
    %v198 = vld [vmem:[%s2 + $0x20] sm:$0xf]
    %v199 = vld [vmem:[%s2 + $0x24] sm:$0xf]
    %v200 = vld [vmem:[%s2 + $0x28] sm:$0xf]
    %v201 = vld [vmem:[%s2 + $0x2c] sm:$0xf]
    %v202 = vld [vmem:[%s2 + $0x30] sm:$0xf]
    %v203 = vld [vmem:[%s2 + $0x34] sm:$0xf]
    %v204 = vld [vmem:[%s2 + $0x38] sm:$0xf]
    %v205 = vld [vmem:[%s3] sm:$0x1]
    %v207 = vlaneseq
    %v208 = vshrl.u32 %v207, 7
    %v209 = vsub.s32 0, %v208
    %v210 = vrot.slane %v205, %v209
    %v227 = vunpack.c.l.b16 %v190
    %v228 = vunpack.c.l.b16 %v191
    %v229 = vunpack.c.l.b16 %v192
    %v230 = vunpack.c.l.b16 %v193
    %v231 = vunpack.c.l.b16 %v194
    %v232 = vunpack.c.l.b16 %v195
    %v233 = vunpack.c.l.b16 %v196
    %v234 = vunpack.c.l.b16 %v197
    %v235 = vunpack.c.l.b16 %v198
    %v236 = vunpack.c.l.b16 %v199
    %v237 = vunpack.c.l.b16 %v200
    %v238 = vunpack.c.l.b16 %v201
    %v239 = vunpack.c.l.b16 %v202
    %v240 = vunpack.c.l.b16 %v203
    %v241 = vunpack.c.l.b16 %v204
    %v242 = vpack.c.b16 %v228, %v227
    %v243 = vpack.c.b16 %v230, %v229
    %v244 = vpack.c.b16 %v232, %v231
    %v245 = vpack.c.b16 %v234, %v233
    %v246 = vpack.c.b16 %v236, %v235
    %v247 = vpack.c.b16 %v238, %v237
    %v248 = vpack.c.b16 %v240, %v239
    %v249 = vpack.c.b16 %v241, %v241
    %v258 = vsel %vm89, %v189, 0
    %v261 = vsel %vm93, %v249, 0
    %263 = vmatprep.subr.bf16.mxu0 0
    %264 = vmatpush1.bf16.msra.mxu0 %v242
    %265 = vmatprep.subr.bf16.mxu0 0
    %266 = vmatpush1.bf16.msra.mxu0 %v243
    %267 = vmatprep.subr.bf16.mxu0 0
    %268 = vmatpush1.bf16.msra.mxu0 %v244
    %269 = vmatprep.subr.bf16.mxu0 0
    %270 = vmatpush1.bf16.msra.mxu0 %v245
    %271 = vmatprep.subr.bf16.mxu0 0
    %272 = vmatpush1.bf16.msra.mxu0 %v246
    %273 = vmatprep.subr.bf16.mxu0 0
    %274 = vmatpush1.bf16.msra.mxu0 %v247
    %275 = vmatprep.subr.bf16.mxu0 0
    %276 = vmatpush1.bf16.msra.mxu0 %v248
    %277 = vmatprep.subr.bf16.mxu0 0
    %278 = vmatpush1.bf16.msra.mxu0 %v261
    %279 = vmatprep.subr.bf16.mxu0 0
    %280 = vmatpush1.bf16.msra.mxu0 0
    %281 = vmatprep.subr.bf16.mxu0 0
    %282 = vmatpush1.bf16.msra.mxu0 0
    %283 = vmatprep.subr.bf16.mxu0 0
    %284 = vmatpush1.bf16.msra.mxu0 0
    %285 = vmatprep.subr.bf16.mxu0 0
    %286 = vmatpush1.bf16.msra.mxu0 0
    %287 = vmatprep.subr.bf16.mxu0 0
    %288 = vmatpush1.bf16.msra.mxu0 0
    %289 = vmatprep.subr.bf16.mxu0 0
    %290 = vmatpush1.bf16.msra.mxu0 0
    %291 = vmatprep.subr.bf16.mxu0 0
    %292 = vmatpush1.bf16.msra.mxu0 0
    %293 = vmatprep.subr.bf16.mxu0 0
    %294 = vmatpush1.bf16.msra.mxu0 0
    %295 = vmatprep.mubr.bf16.mxu0 0
    %296 = vmatmul.mubr.bf16.gmra.mrb[0].mxu0 %v258
    %v297 = vpop.f32.mrb[0].mxu0
    %v298 = vadd.f32 %v210, %v297
    %v299 = vpop.f32.mrb[0].mxu0
    %v300 = vpop.f32.mrb[0].mxu0
    %v301 = vpop.f32.mrb[0].mxu0
    %302 = vdwg.mxu0
    %v303 = vmax.f32 %v298, 0.0
    %v304 = vpack.c.bf16 %v303, %v303
    %v305 = vld [vmem:[%s4] sm:$0xf]
    %v306 = vld [vmem:[%s4 + $0x4] sm:$0xf]
    %v307 = vld [vmem:[%s4 + $0x8] sm:$0xf]
    %v308 = vld [vmem:[%s4 + $0xc] sm:$0xf]
    %v309 = vld [vmem:[%s4 + $0x10] sm:$0xf]
    %v310 = vld [vmem:[%s4 + $0x14] sm:$0xf]
    %v311 = vld [vmem:[%s4 + $0x18] sm:$0xf]
    %v312 = vld [vmem:[%s4 + $0x1c] sm:$0xf]
    %v313 = vld [vmem:[%s4 + $0x20] sm:$0xf]
    %v314 = vld [vmem:[%s4 + $0x24] sm:$0xf]
    %v315 = vld [vmem:[%s4 + $0x28] sm:$0xf]
    %v316 = vld [vmem:[%s4 + $0x2c] sm:$0xf]
    %v317 = vld [vmem:[%s4 + $0x30] sm:$0xf]
    %v318 = vld [vmem:[%s4 + $0x34] sm:$0xf]
    %v319 = vld [vmem:[%s4 + $0x38] sm:$0xf]
    %v320 = vld [vmem:[%s4 + $0x3c] sm:$0xf]
    %v321 = vld [vmem:[%s5] sm:$0x1]
    %v323 = vlaneseq
    %v324 = vshrl.u32 %v323, 7
    %v325 = vsub.s32 0, %v324
    %v326 = vrot.slane %v321, %v325
    %v344 = vunpack.c.l.b16 %v305
    %v345 = vunpack.c.l.b16 %v306
    %v346 = vunpack.c.l.b16 %v307
    %v347 = vunpack.c.l.b16 %v308
    %v348 = vunpack.c.l.b16 %v309
    %v349 = vunpack.c.l.b16 %v310
    %v350 = vunpack.c.l.b16 %v311
    %v351 = vunpack.c.l.b16 %v312
    %v352 = vunpack.c.l.b16 %v313
    %v353 = vunpack.c.l.b16 %v314
    %v354 = vunpack.c.l.b16 %v315
    %v355 = vunpack.c.l.b16 %v316
    %v356 = vunpack.c.l.b16 %v317
    %v357 = vunpack.c.l.b16 %v318
    %v358 = vunpack.c.l.b16 %v319
    %v359 = vunpack.c.l.b16 %v320
    %v360 = vpack.c.b16 %v345, %v344
    %v361 = vpack.c.b16 %v347, %v346
    %v362 = vpack.c.b16 %v349, %v348
    %v363 = vpack.c.b16 %v351, %v350
    %v364 = vpack.c.b16 %v353, %v352
    %v365 = vpack.c.b16 %v355, %v354
    %v366 = vpack.c.b16 %v357, %v356
    %v367 = vpack.c.b16 %v359, %v358
    %376 = vmatprep.subr.bf16.mxu0 0
    %377 = vmatpush1.bf16.msra.mxu0 %v360
    %378 = vmatprep.subr.bf16.mxu0 0
    %379 = vmatpush1.bf16.msra.mxu0 %v361
    %380 = vmatprep.subr.bf16.mxu0 0
    %381 = vmatpush1.bf16.msra.mxu0 %v362
    %382 = vmatprep.subr.bf16.mxu0 0
    %383 = vmatpush1.bf16.msra.mxu0 %v363
    %384 = vmatprep.subr.bf16.mxu0 0
    %385 = vmatpush1.bf16.msra.mxu0 %v364
    %386 = vmatprep.subr.bf16.mxu0 0
    %387 = vmatpush1.bf16.msra.mxu0 %v365
    %388 = vmatprep.subr.bf16.mxu0 0
    %389 = vmatpush1.bf16.msra.mxu0 %v366
    %390 = vmatprep.subr.bf16.mxu0 0
    %391 = vmatpush1.bf16.msra.mxu0 %v367
    %392 = vmatprep.subr.bf16.mxu0 0
    %393 = vmatpush1.bf16.msra.mxu0 0
    %394 = vmatprep.subr.bf16.mxu0 0
    %395 = vmatpush1.bf16.msra.mxu0 0
    %396 = vmatprep.subr.bf16.mxu0 0
    %397 = vmatpush1.bf16.msra.mxu0 0
    %398 = vmatprep.subr.bf16.mxu0 0
    %399 = vmatpush1.bf16.msra.mxu0 0
    %400 = vmatprep.subr.bf16.mxu0 0
    %401 = vmatpush1.bf16.msra.mxu0 0
    %402 = vmatprep.subr.bf16.mxu0 0
    %403 = vmatpush1.bf16.msra.mxu0 0
    %404 = vmatprep.subr.bf16.mxu0 0
    %405 = vmatpush1.bf16.msra.mxu0 0
    %406 = vmatprep.subr.bf16.mxu0 0
    %407 = vmatpush1.bf16.msra.mxu0 0
    %408 = vmatprep.mubr.bf16.mxu0 0
    %409 = vmatmul.mubr.bf16.gmra.mrb[0].mxu0 %v304
    %v410 = vpop.f32.mrb[0].mxu0
    %v411 = vadd.f32 %v326, %v410
    %v412 = vpop.f32.mrb[0].mxu0
    %v413 = vpop.f32.mrb[0].mxu0
    %v414 = vpop.f32.mrb[0].mxu0
    %415 = vdwg.mxu0
    %vm416 = vcmask 91136
    %417 = vst.msk [vmem:[#allocation2] sm:$0x3] %vm416, %v411
    // Predicated region
    $region26: #{mlp_forward.1} parent=1 // pred_check
      _
    $region27: #{mlp_forward.1} parent=1 // pred_check_branch
      %419 = sbr.rel (0) target = $region29
    $region28: #{mlp_forward.1} parent=1 // pred_region
      %s421 = ssub.s32 32, 32
      %422 = vsyncadd [#allocation3], %s421
      %s424 = sshll.u32 [#allocation2], 4
      %s425 = int_to_ptr.vmem [resolvable:$true] %s424
      %427 = dma.vmem_to_hbm [thread:$0]  %s425, 32, %s6, [#allocation3]
    $region29: #{mlp_forward.1} parent=1 // pred_fallthru
      _
    // Predicated region
    $region30: #{mlp_forward.1} parent=1 // pred_check
      _
    $region31: #{mlp_forward.1} parent=1 // pred_check_branch
      %429 = sbr.rel (0) target = $region33
    $region32: #{mlp_forward.1} parent=1 // pred_region
      %430 = dma.done [#allocation3], 32
    $region33: #{mlp_forward.1} parent=1 // pred_fallthru
      _
    %431 = vsyncpa [#allocation3], 1

</llo_original>
